<compile_context>
chip_gen: v7x
topology: tpu7x:2x2x1
jax: 0.10.0
libtpu: 0.0.40
codegen_flags: <defaults>
</compile_context>

<pallas_src>
from functools import partial

import jax
import jax.numpy as jnp
from jax.experimental import pallas as pl
from jax.experimental.pallas import tpu as pltpu


def _label_smooth_kernel(trg_ref, out_ref, *, confidence_value, smoothing_fill,
                         pad_token_id):
    # trg_ref: (tb, 1) int32 block of target token ids
    # out_ref: (tb, tile_v) output tile of the smoothed distribution
    j = pl.program_id(1)
    tb, tv = out_ref.shape

    trg = trg_ref[...]                       # (tb, 1) int32
    is_pad_row = trg == pad_token_id         # (tb, 1) bool

    # Fold the pad-row zeroing into per-row fill / confidence values (cheap:
    # (tb, 1) work) instead of a third full-tile select.
    row_fill = jnp.where(is_pad_row, jnp.float32(0.0),
                         jnp.float32(smoothing_fill))        # (tb, 1)
    row_conf = jnp.where(is_pad_row, jnp.float32(0.0),
                         jnp.float32(confidence_value))      # (tb, 1)

    # Global vocab (column) index of every element in this tile.
    col = jax.lax.broadcasted_iota(jnp.int32, (tb, tv), 1) + j * tv

    val = jnp.where(col == trg, row_conf, row_fill)          # scatter target
    val = jnp.where(col == pad_token_id, jnp.float32(0.0), val)  # pad column

    out_ref[...] = val.astype(out_ref.dtype)                 # single store


def _choose_tiles(B, V, bytes_per_elem, block_budget_bytes=4 * 1024 * 1024):
    """Pick (tb, tile_v) so a single output block stays under the budget.

    tb is the full batch (always layout-legal) when B <= 512, else a multiple
    of 8. tile_v is the largest multiple of 128 lanes that fits the budget,
    capped at V rounded up to 128.
    """
    tb = B if B <= 512 else 512
    v_padded = pl.cdiv(V, 128) * 128
    max_tv = (block_budget_bytes // (tb * bytes_per_elem)) // 128 * 128
    tile_v = int(min(max(128, max_tv), v_padded))
    return tb, tile_v


def label_smoothing_distribution(trg_token_ids_batch, *, smoothing_value,
                                 pad_token_id, trg_vocab_size,
                                 out_dtype=jnp.float32):
    """Pallas equivalent of LabelSmoothingDistribution.forward.

    trg_token_ids_batch: (B, 1) integer array of target token ids
    returns: (B, trg_vocab_size) array of dtype `out_dtype` (default float32)
    """
    assert 0.0 <= smoothing_value <= 1.0
    assert trg_vocab_size > 2, "vocab must have room for pad + target tokens"
    B = trg_token_ids_batch.shape[0]
    V = trg_vocab_size
    confidence_value = 1.0 - smoothing_value
    smoothing_fill = smoothing_value / (V - 2)

    bytes_per_elem = jnp.dtype(out_dtype).itemsize
    tb, tile_v = _choose_tiles(B, V, bytes_per_elem)
    grid = (pl.cdiv(B, tb), pl.cdiv(V, tile_v))

    kernel = partial(
        _label_smooth_kernel,
        confidence_value=confidence_value,
        smoothing_fill=smoothing_fill,
        pad_token_id=pad_token_id,
    )

    return pl.pallas_call(
        kernel,
        out_shape=jax.ShapeDtypeStruct((B, V), out_dtype),
        grid_spec=pltpu.PrefetchScalarGridSpec(
            num_scalar_prefetch=0,
            grid=grid,
            in_specs=[
                # target ids blocked along the batch axis together with the
                # output (tiny: (tb, 1) int32 pads to (tb, 128) words in VMEM).
                pl.BlockSpec((tb, 1), lambda i, j: (i, 0)),
            ],
            out_specs=pl.BlockSpec((tb, tile_v), lambda i, j: (i, j)),
        ),
        compiler_params=pltpu.CompilerParams(
            dimension_semantics=("parallel", "parallel")),
    )(trg_token_ids_batch.astype(jnp.int32))


def _reference(trg, smoothing_value, pad_token_id, V):
    B = trg.shape[0]
    conf = 1.0 - smoothing_value
    fill = smoothing_value / (V - 2)
    dist = jnp.full((B, V), fill, dtype=jnp.float32)
    dist = dist.at[jnp.arange(B), trg[:, 0]].set(conf)     # scatter_(1, trg, conf)
    dist = dist.at[:, pad_token_id].set(0.0)
    dist = jnp.where(trg == pad_token_id, 0.0, dist)
    return dist


def _run_case(key, batch_size, trg_vocab_size, smoothing_value, pad_token_id):
    trg = jax.random.randint(key, (batch_size, 1), minval=1,
                             maxval=trg_vocab_size, dtype=jnp.int32)
    # make one row a pad token to exercise the row-masking path
    trg = trg.at[batch_size // 2, 0].set(pad_token_id)

    out = label_smoothing_distribution(
        trg,
        smoothing_value=smoothing_value,
        pad_token_id=pad_token_id,
        trg_vocab_size=trg_vocab_size,
    )
    out = jax.block_until_ready(out)

    ref = _reference(trg, smoothing_value, pad_token_id, trg_vocab_size)
    assert out.shape == (batch_size, trg_vocab_size)
    assert out.dtype == jnp.float32
    assert jnp.allclose(out, ref, atol=1e-6), "mismatch vs reference"


if __name__ == "__main__":
    smoothing_value = 0.1
    pad_token_id = 0

    key = jax.random.PRNGKey(0)
    k1, k2 = jax.random.split(key)

    # Small deterministic case: batch=8, vocab=512 (tile-aligned).
    _run_case(k1, batch_size=8, trg_vocab_size=512,
              smoothing_value=smoothing_value, pad_token_id=pad_token_id)

    # Ragged case: batch=12, vocab=500 (exercises the partial last vocab tile).
    _run_case(k2, batch_size=12, trg_vocab_size=500,
              smoothing_value=smoothing_value, pad_token_id=pad_token_id)

    print("KERNEL_OK")
</pallas_src>

<mosaic_0001>
module attributes {stable_mosaic.version = 11 : i64} {
  func.func @_label_smooth_kernel(%arg0: i32, %arg1: i32, %arg2: memref<8x1xi32, #tpu.memory_space<vmem>>, %arg3: memref<8x512xf32, #tpu.memory_space<vmem>>) attributes {dimension_semantics = [#tpu.dimension_semantics<parallel>, #tpu.dimension_semantics<parallel>], iteration_bounds = array<i64: 1, 1>, scalar_prefetch = 0 : i64, scratch_operands = 0 : i64, tpu.core_type = #tpu.core_type<tc>, window_params = [{transform_indices = @transform_0, window_bounds = array<i64: 8, 1>}, {transform_indices = @transform_1, window_bounds = array<i64: 8, 512>}]} {
    %c0 = arith.constant 0 : index
    %c0_0 = arith.constant 0 : index
    %0 = vector.load %arg2[%c0, %c0_0] : memref<8x1xi32, #tpu.memory_space<vmem>>, vector<8x1xi32>
    %c0_i32 = arith.constant 0 : i32
    %1 = vector.broadcast %c0_i32 : i32 to vector<8x1xi32>
    %2 = arith.cmpi eq, %0, %1 : vector<8x1xi32>
    %cst = arith.constant 0.000000e+00 : f32
    %cst_1 = arith.constant 1.96078428E-4 : f32
    %3 = vector.broadcast %cst : f32 to vector<8x1xf32>
    %4 = vector.broadcast %cst_1 : f32 to vector<8x1xf32>
    %5 = arith.select %2, %3, %4 : vector<8x1xi1>, vector<8x1xf32>
    %cst_2 = arith.constant 0.000000e+00 : f32
    %cst_3 = arith.constant 0.899999976 : f32
    %6 = vector.broadcast %cst_2 : f32 to vector<8x1xf32>
    %7 = vector.broadcast %cst_3 : f32 to vector<8x1xf32>
    %8 = arith.select %2, %6, %7 : vector<8x1xi1>, vector<8x1xf32>
    %9 = tpu.iota {dimensions = array<i32: 1>} : vector<8x512xi32>
    %c512_i32 = arith.constant 512 : i32
    %10 = arith.muli %arg1, %c512_i32 : i32
    %11 = vector.broadcast %10 : i32 to vector<8x512xi32>
    %12 = arith.addi %9, %11 : vector<8x512xi32>
    %13 = vector.broadcast %0 : vector<8x1xi32> to vector<8x512xi32>
    %14 = arith.cmpi eq, %12, %13 : vector<8x512xi32>
    %15 = vector.shape_cast %8 : vector<8x1xf32> to vector<8x1xf32>
    %16 = vector.broadcast %15 : vector<8x1xf32> to vector<8x512xf32>
    %17 = vector.shape_cast %5 : vector<8x1xf32> to vector<8x1xf32>
    %18 = vector.broadcast %17 : vector<8x1xf32> to vector<8x512xf32>
    %19 = arith.select %14, %16, %18 : vector<8x512xi1>, vector<8x512xf32>
    %c0_i32_4 = arith.constant 0 : i32
    %20 = vector.broadcast %c0_i32_4 : i32 to vector<8x512xi32>
    %21 = arith.cmpi eq, %12, %20 : vector<8x512xi32>
    %cst_5 = arith.constant 0.000000e+00 : f32
    %22 = vector.broadcast %cst_5 : f32 to vector<8x512xf32>
    %23 = arith.select %21, %22, %19 : vector<8x512xi1>, vector<8x512xf32>
    %c0_6 = arith.constant 0 : index
    %c0_7 = arith.constant 0 : index
    %24 = vector.load %arg3[%c0_6, %c0_7] : memref<8x512xf32, #tpu.memory_space<vmem>>, vector<8x512xf32>
    tpu.vector_store %arg3[%c0_6, %c0_7], %23 {strides = array<i32>} : memref<8x512xf32, #tpu.memory_space<vmem>>, vector<8x512xf32>,
    return
  }
  func.func @transform_0(%arg0: i32, %arg1: i32) -> (i32, i32) {
    %c0_i32 = arith.constant 0 : i32
    %c0_i32_0 = arith.constant 0 : i32
    return %arg0, %c0_i32 : i32, i32
  }
  func.func @transform_1(%arg0: i32, %arg1: i32) -> (i32, i32) {
    %c0_i32 = arith.constant 0 : i32
    return %arg0, %arg1 : i32, i32
  }
}

</mosaic_0001>

<llo_original>
// kernel: tpu_custom_call.1
$region0: #{tpu_custom_call.1}
  #allocation0 [shape = 'u32[]', space=smem, size = 0x4, offset = 0x4, fixed_abs, tag = 'smem constant byte address 0x4 - core index']
  #allocation1 [shape = 'u32[144,128]{1,0:T(1,128)}', space=vmem, size = 0x12000, scoped, tag = 'internal scratch']
  %s0 = inlined_call_operand.vmem [shape: s32[8,1], index: 0, kind: input, shape index: {}]
  %s1 = inlined_call_operand.hbm [shape: f32[8,512], index: 1, kind: output, shape index: {}]
  %s2 = sld [smem:[#allocation0]]
  $region14: #{tpu_custom_call.1} parent=0
    _
  %s4 = ssub.s32 1, %s2
  %s5 = scalar_select 0, %s4, %s2
  $region1: #{tpu_custom_call.1} parent=0
    #allocation2 [shape = 'u8[16384]{0}', space=vmem, size = 0x4000, scoped, tag = 'output window, operand 0, single buffered']
    #allocation3 [shape = 's32[1]{0}', space=sflag, size = 0x4, scoped, tag = 'scoped memory for tpu_custom_call.1']
    %6 = vsyncpa [#allocation3], 0
    // Predicated region
    $region2: #{tpu_custom_call.1} parent=1 // pred_check
      _
    $region3: #{tpu_custom_call.1} parent=1 // pred_check_branch
      %8 = sbr.rel (0) target = $region5
    $region4: #{tpu_custom_call.1} parent=1 // pred_region
      _
    $region5: #{tpu_custom_call.1} parent=1 // pred_fallthru
      _
    %v9 = vld [vmem:[%s0] sm:$0xff]
    %vm10 = vcmp.eq.s32.totalorder %v9, 0
    %v11 = vsel %vm10, 0.0, 0.00019607843
    %v12 = vsel %vm10, 0.0, 0.9
    %v13 = vlaneseq
    %v14 = vand.u32 %v13, 127
    %v15 = vadd.s32 %v14, 128
    %v16 = vadd.s32 %v14, 256
    %v17 = vadd.s32 %v14, 384
    %s18 = smul.u32 0, 512
    %v19 = vstv %s18
    %v20 = vadd.s32 %v14, %v19
    %v21 = vadd.s32 %v15, %v19
    %v22 = vadd.s32 %v16, %v19
    %v23 = vadd.s32 %v17, %v19
    %24 = vset.pattern.permute.xlu0 0
    %25 = vperm.xlu0 %24, %v9
    %v26 = vpop.permute.xlu0 %25
    %vm27 = vcmp.eq.s32.totalorder %v20, %v26
    %vm28 = vcmp.eq.s32.totalorder %v21, %v26
    %vm29 = vcmp.eq.s32.totalorder %v22, %v26
    %vm30 = vcmp.eq.s32.totalorder %v23, %v26
    %32 = vset.pattern.permute.xlu0 0
    %33 = vperm.xlu0 %32, %v12
    %v34 = vpop.permute.xlu0 %33
    %37 = vset.pattern.permute.xlu0 0
    %38 = vperm.xlu0 %37, %v11
    %v39 = vpop.permute.xlu0 %38
    %v41 = vsel %vm27, %v34, %v39
    %v42 = vsel %vm28, %v34, %v39
    %v43 = vsel %vm29, %v34, %v39
    %v44 = vsel %vm30, %v34, %v39
    %vm45 = vcmp.eq.s32.totalorder %v20, 0
    %vm46 = vcmp.eq.s32.totalorder %v21, 0
    %vm47 = vcmp.eq.s32.totalorder %v22, 0
    %vm48 = vcmp.eq.s32.totalorder %v23, 0
    %v49 = vsel %vm45, 0.0, %v41
    %v50 = vsel %vm46, 0.0, %v42
    %v51 = vsel %vm47, 0.0, %v43
    %v52 = vsel %vm48, 0.0, %v44
    %53 = vst [vmem:[#allocation2] sm:$0xff] %v49
    %54 = vst [vmem:[#allocation2 + $0x8] sm:$0xff] %v50
    %55 = vst [vmem:[#allocation2 + $0x10] sm:$0xff] %v51
    %56 = vst [vmem:[#allocation2 + $0x18] sm:$0xff] %v52
    // Predicated region
    $region6: #{tpu_custom_call.1} parent=1 // pred_check
      _
    $region7: #{tpu_custom_call.1} parent=1 // pred_check_branch
      %58 = sbr.rel (0) target = $region9
    $region8: #{tpu_custom_call.1} parent=1 // pred_region
      %s60 = ssub.s32 512, 512
      %61 = vsyncadd [#allocation3], %s60
      %s63 = sshll.u32 [#allocation2], 4
      %s64 = int_to_ptr.vmem [resolvable:$true] %s63
      %66 = dma.vmem_to_hbm [thread:$0]  %s64, 512, %s1, [#allocation3]
    $region9: #{tpu_custom_call.1} parent=1 // pred_fallthru
      _
    // Predicated region
    $region10: #{tpu_custom_call.1} parent=1 // pred_check
      _
    $region11: #{tpu_custom_call.1} parent=1 // pred_check_branch
      %68 = sbr.rel (0) target = $region13
    $region12: #{tpu_custom_call.1} parent=1 // pred_region
      %69 = dma.done [#allocation3], 512
    $region13: #{tpu_custom_call.1} parent=1 // pred_fallthru
      _
    %70 = vsyncpa [#allocation3], 1

</llo_original>
